<compile_context>
chip_gen: v5e
topology: v5e:2x2
jax: 0.10.0
libtpu: 0.0.40
codegen_flags: <defaults>
</compile_context>

<pallas_src>
import functools

import jax
import jax.numpy as jnp
from jax.experimental import pallas as pl
from jax.experimental.pallas import tpu as pltpu

D_DIM = 64
EPS = 1e-6
LANES = 512                      # lane-dense slab width (multiple of 128)
TARGET_BLOCK_BYTES = 2 << 20     # ~2 MiB per input block


def _rmse_kernel(yhat_ref, y_ref, out_ref, acc_ref, *, inv_n, eps):
    i = pl.program_id(0)

    @pl.when(i == 0)
    def _():
        acc_ref[...] = jnp.zeros_like(acc_ref)

    # Cast per-tile (inputs stream through DMA in their original dtype).
    d = yhat_ref[...].astype(jnp.float32) - y_ref[...].astype(jnp.float32)
    sq = d * d
    # (block_rows, LANES) -> (block_rows//8, 8, LANES); sum over full-vreg
    # chunks keeps the hot path as pure VPU adds into a vreg-shaped VMEM
    # accumulator (no per-step cross-lane reduce, no SMEM scalar round-trip).
    acc_ref[...] += sq.reshape(-1, 8, sq.shape[-1]).sum(axis=0)

    @pl.when(i == pl.num_programs(0) - 1)
    def _():
        total = jnp.sum(acc_ref[...])          # single epilogue XLU reduce
        out_ref[0, 0] = jnp.sqrt(total * jnp.float32(inv_n) + jnp.float32(eps))


def rmse_loss(yhat, y, eps=EPS, lanes=LANES,
              target_block_bytes=TARGET_BLOCK_BYTES):
    assert yhat.shape == y.shape, "yhat and y must have the same shape"
    total_n = yhat.size
    assert total_n > 0

    # Flatten; do NOT promote dtype here (cast happens per-tile in-kernel).
    yhat1 = yhat.reshape(-1)
    y1 = y.reshape(-1)
    dtype_bytes = jnp.dtype(yhat1.dtype).itemsize

    # Rows of the lane-dense slab before padding.
    rows = -(-total_n // lanes)

    # Block rows from a byte budget, rounded to a multiple of 8, clamped to
    # the (8-rounded) row count so small inputs use a single small block.
    br = max(8, (target_block_bytes // (lanes * dtype_bytes)) // 8 * 8)
    br = min(br, ((rows + 7) // 8) * 8)

    # Pad rows up to a multiple of the block; zero padding is exact for the
    # sum of squared differences (both inputs padded with the same zeros).
    rows_padded = -(-rows // br) * br
    padded_len = rows_padded * lanes
    pad = padded_len - total_n
    if pad:
        yhat1 = jnp.pad(yhat1, (0, pad))
        y1 = jnp.pad(y1, (0, pad))
    yhat2 = yhat1.reshape(rows_padded, lanes)
    y2 = y1.reshape(rows_padded, lanes)

    grid = (rows_padded // br,)
    inv_n = 1.0 / float(total_n)   # precomputed: multiply, don't divide

    kernel = functools.partial(_rmse_kernel, inv_n=inv_n, eps=eps)

    out = pl.pallas_call(
        kernel,
        out_shape=jax.ShapeDtypeStruct((1, 1), jnp.float32),
        grid_spec=pltpu.PrefetchScalarGridSpec(
            num_scalar_prefetch=0,
            grid=grid,
            in_specs=[
                pl.BlockSpec((br, lanes), lambda i: (i, 0)),
                pl.BlockSpec((br, lanes), lambda i: (i, 0)),
            ],
            out_specs=pl.BlockSpec(memory_space=pltpu.SMEM),
            scratch_shapes=[pltpu.VMEM((8, lanes), jnp.float32)],
        ),
        compiler_params=pltpu.CompilerParams(
            # Carried accumulator => the grid axis MUST stay sequential.
            dimension_semantics=("arbitrary",),
        ),
    )(yhat2, y2)
    return out[0, 0]


if __name__ == "__main__":
    key = jax.random.PRNGKey(0)

    # Small shapes consistent with the module: predictions over D_DIM=64 bins.
    batch = 16
    yhat = jax.random.normal(key, (batch, D_DIM), dtype=jnp.float32) * 0.1
    y_line = jnp.linspace(-0.45, 0.45, D_DIM, dtype=jnp.float32)
    y = jnp.broadcast_to(y_line, (batch, D_DIM))

    loss = rmse_loss(yhat, y)
    jax.block_until_ready(loss)

    # Reference check in plain JAX (same math as torch.sqrt(MSELoss + eps)).
    ref = jnp.sqrt(jnp.mean((yhat - y) ** 2) + EPS)
    assert jnp.allclose(loss, ref, rtol=1e-5, atol=1e-6), (loss, ref)

    # Also sanity-check a ragged / larger shape exercising padding + tiling.
    yhat_big = jax.random.normal(jax.random.PRNGKey(1), (1000, 3, 7),
                                 dtype=jnp.float32)
    y_big = jax.random.normal(jax.random.PRNGKey(2), (1000, 3, 7),
                              dtype=jnp.float32)
    loss_big = rmse_loss(yhat_big, y_big)
    jax.block_until_ready(loss_big)
    ref_big = jnp.sqrt(jnp.mean((yhat_big - y_big) ** 2) + EPS)
    assert jnp.allclose(loss_big, ref_big, rtol=1e-5, atol=1e-6), (loss_big, ref_big)

    print("KERNEL_OK")
</pallas_src>

<mosaic_0001>
module attributes {stable_mosaic.version = 11 : i64} {
  func.func @_rmse_kernel(%arg0: i32, %arg1: memref<8x512xf32, #tpu.memory_space<vmem>>, %arg2: memref<8x512xf32, #tpu.memory_space<vmem>>, %arg3: memref<1x1xf32, #tpu.memory_space<smem>>, %arg4: memref<8x512xf32, #tpu.memory_space<vmem>>) attributes {dimension_semantics = [#tpu.dimension_semantics<arbitrary>], iteration_bounds = array<i64: 1>, scalar_prefetch = 0 : i64, scratch_operands = 1 : i64, tpu.core_type = #tpu.core_type<tc>, window_params = [{transform_indices = @transform_0, window_bounds = array<i64: 8, 512>}, {transform_indices = @transform_1, window_bounds = array<i64: 8, 512>}, {transform_indices = @transform_2, window_bounds = array<i64: 1, 1>}]} {
    %c0_i32 = arith.constant 0 : i32
    %0 = arith.cmpi eq, %arg0, %c0_i32 : i32
    %1 = arith.extui %0 : i1 to i32
    %c0_i32_0 = arith.constant 0 : i32
    %2 = arith.cmpi ne, %1, %c0_i32_0 : i32
    scf.if %2 {
      %cst_10 = arith.constant 0.000000e+00 : f32
      %15 = vector.broadcast %cst_10 : f32 to vector<8x512xf32>
      %c0_11 = arith.constant 0 : index
      %c0_12 = arith.constant 0 : index
      %16 = vector.load %arg4[%c0_11, %c0_12] : memref<8x512xf32, #tpu.memory_space<vmem>>, vector<8x512xf32>
      tpu.vector_store %arg4[%c0_11, %c0_12], %15 {strides = array<i32>} : memref<8x512xf32, #tpu.memory_space<vmem>>, vector<8x512xf32>,
    } else {
    }
    %c0 = arith.constant 0 : index
    %c0_1 = arith.constant 0 : index
    %3 = vector.load %arg1[%c0, %c0_1] : memref<8x512xf32, #tpu.memory_space<vmem>>, vector<8x512xf32>
    %c0_2 = arith.constant 0 : index
    %c0_3 = arith.constant 0 : index
    %4 = vector.load %arg2[%c0_2, %c0_3] : memref<8x512xf32, #tpu.memory_space<vmem>>, vector<8x512xf32>
    %5 = arith.subf %3, %4 : vector<8x512xf32>
    %6 = arith.mulf %5, %5 : vector<8x512xf32>
    %c0_4 = arith.constant 0 : index
    %c0_5 = arith.constant 0 : index
    %7 = vector.load %arg4[%c0_4, %c0_5] : memref<8x512xf32, #tpu.memory_space<vmem>>, vector<8x512xf32>
    %8 = vector.shape_cast %6 : vector<8x512xf32> to vector<1x8x512xf32>
    %cst = arith.constant dense<0.000000e+00> : vector<8x512xf32>
    %9 = vector.multi_reduction <add>, %8, %cst [0] : vector<1x8x512xf32> to vector<8x512xf32>
    %10 = arith.addf %7, %9 : vector<8x512xf32>
    %c0_6 = arith.constant 0 : index
    %c0_7 = arith.constant 0 : index
    %11 = vector.load %arg4[%c0_6, %c0_7] : memref<8x512xf32, #tpu.memory_space<vmem>>, vector<8x512xf32>
    tpu.vector_store %arg4[%c0_6, %c0_7], %10 {strides = array<i32>} : memref<8x512xf32, #tpu.memory_space<vmem>>, vector<8x512xf32>,
    %c0_i32_8 = arith.constant 0 : i32
    %12 = arith.cmpi eq, %arg0, %c0_i32_8 : i32
    %13 = arith.extui %12 : i1 to i32
    %c0_i32_9 = arith.constant 0 : i32
    %14 = arith.cmpi ne, %13, %c0_i32_9 : i32
    scf.if %14 {
      %c0_10 = arith.constant 0 : index
      %c0_11 = arith.constant 0 : index
      %15 = vector.load %arg4[%c0_10, %c0_11] : memref<8x512xf32, #tpu.memory_space<vmem>>, vector<8x512xf32>
      %16 = vector.shape_cast %15 : vector<8x512xf32> to vector<1x8x512xf32>
      %cst_12 = arith.constant dense<0.000000e+00> : vector<1xf32>
      %17 = vector.multi_reduction <add>, %16, %cst_12 [1, 2] : vector<1x8x512xf32> to vector<1xf32>
      %18 = vector.shape_cast %17 : vector<1xf32> to vector<1x1x1xf32>
      %19 = vector.extract %18[0, 0, 0] : f32 from vector<1x1x1xf32>
      %cst_13 = arith.constant 9.765625E-4 : f32
      %20 = arith.mulf %19, %cst_13 : f32
      %cst_14 = arith.constant 9.99999997E-7 : f32
      %21 = arith.addf %20, %cst_14 : f32
      %22 = math.sqrt %21 : f32
      %c0_15 = arith.constant 0 : index
      %c0_16 = arith.constant 0 : index
      %23 = memref.load %arg3[%c0_15, %c0_16] : memref<1x1xf32, #tpu.memory_space<smem>>
      memref.store %22, %arg3[%c0_15, %c0_16] : memref<1x1xf32, #tpu.memory_space<smem>>
    } else {
    }
    return
  }
  func.func @transform_0(%arg0: i32) -> (i32, i32) {
    %c0_i32 = arith.constant 0 : i32
    %c0_i32_0 = arith.constant 0 : i32
    return %arg0, %c0_i32 : i32, i32
  }
  func.func @transform_1(%arg0: i32) -> (i32, i32) {
    %c0_i32 = arith.constant 0 : i32
    %c0_i32_0 = arith.constant 0 : i32
    return %arg0, %c0_i32 : i32, i32
  }
  func.func @transform_2(%arg0: i32) -> (i32, i32) {
    %c0_i32 = arith.constant 0 : i32
    %c0_i32_0 = arith.constant 0 : i32
    %c0_i32_1 = arith.constant 0 : i32
    return %c0_i32, %c0_i32_0 : i32, i32
  }
}

</mosaic_0001>

<llo_original>
// kernel: tpu_custom_call.1
$region0: #{tpu_custom_call.1}
  #allocation0 [shape = 'u32[]', space=smem, size = 0x4, offset = 0x4, fixed_abs, tag = 'smem constant byte address 0x4 - core index']
  #allocation1 [shape = 'u32[72,128]{1,0:T(1,128)}', space=vmem, size = 0x9000, scoped, tag = 'internal scratch']
  #allocation2 [shape = 'f32[8,512]{1,0:T(8,128)}', space=vmem, size = 0x4000, scoped, tag = 'scratch operand']
  %s0 = inlined_call_operand.hbm [shape: f32[8,512], index: 0, kind: input, shape index: {}]
  %s1 = inlined_call_operand.hbm [shape: f32[8,512], index: 1, kind: input, shape index: {}]
  %s2 = inlined_call_operand.hbm [shape: f32[1,1], index: 2, kind: output, shape index: {}]
  %s3 = sld [smem:[#allocation0]]
  $region34: #{tpu_custom_call.1} parent=0
    _
  %s5 = ssub.s32 1, %s3
  %s6 = scalar_select 0, %s5, %s3
  $region1: #{tpu_custom_call.1} parent=0
    #allocation3 [shape = 'u8[16384]{0}', space=vmem, size = 0x4000, scoped, tag = 'input window, operand 0, single buffered']
    #allocation4 [shape = 's32[1]{0}', space=sflag, size = 0x4, scoped, tag = 'scoped memory for tpu_custom_call.1']
    #allocation5 [shape = 's32[1]{0}', space=sflag, size = 0x4, scoped, tag = 'scoped memory for tpu_custom_call.1']
    #allocation6 [shape = 'u8[16384]{0}', space=vmem, size = 0x4000, scoped, tag = 'input window, operand 1, single buffered']
    #allocation7 [shape = 's32[1]{0}', space=sflag, size = 0x4, scoped, tag = 'scoped memory for tpu_custom_call.1']
    #allocation8 [shape = 'u8[512]{0}', space=smem, size = 0x200, scoped, tag = 'output window, operand 0, single buffered']
    %7 = vsyncpa [#allocation4], 0
    %8 = vsyncpa [#allocation7], 0
    %9 = vsyncpa [#allocation5], 0
    // Predicated region
    $region2: #{tpu_custom_call.1} parent=1 // pred_check
      _
    $region3: #{tpu_custom_call.1} parent=1 // pred_check_branch
      %11 = sbr.rel (0) target = $region5
    $region4: #{tpu_custom_call.1} parent=1 // pred_region
      %13 = vsyncadd [#allocation4], 0
      %s15 = sshll.u32 %s0, 4
      %s16 = int_to_ptr.hbm [resolvable:$true] %s15
      %s17 = sshll.u32 [#allocation3], 4
      %s18 = int_to_ptr.vmem [resolvable:$true] %s17
      %20 = dma.hbm_to_vmem [thread:$0]  %s16, 512, %s18, [#allocation4]
    $region5: #{tpu_custom_call.1} parent=1 // pred_fallthru
      _
    // Predicated region
    $region6: #{tpu_custom_call.1} parent=1 // pred_check
      _
    $region7: #{tpu_custom_call.1} parent=1 // pred_check_branch
      %22 = sbr.rel (0) target = $region9
    $region8: #{tpu_custom_call.1} parent=1 // pred_region
      %24 = vsyncadd [#allocation7], 0
      %s26 = sshll.u32 %s1, 4
      %s27 = int_to_ptr.hbm [resolvable:$true] %s26
      %s28 = sshll.u32 [#allocation6], 4
      %s29 = int_to_ptr.vmem [resolvable:$true] %s28
      %31 = dma.hbm_to_vmem [thread:$0]  %s27, 512, %s29, [#allocation7]
    $region9: #{tpu_custom_call.1} parent=1 // pred_fallthru
      _
    // Predicated region
    $region10: #{tpu_custom_call.1} parent=1 // pred_check
      _
    $region11: #{tpu_custom_call.1} parent=1 // pred_check_branch
      %33 = sbr.rel (0) target = $region13
    $region12: #{tpu_custom_call.1} parent=1 // pred_region
      %35 = dma.done [#allocation4], 512
    $region13: #{tpu_custom_call.1} parent=1 // pred_fallthru
      _
    // Predicated region
    $region14: #{tpu_custom_call.1} parent=1 // pred_check
      _
    $region15: #{tpu_custom_call.1} parent=1 // pred_check_branch
      %37 = sbr.rel (0) target = $region17
    $region16: #{tpu_custom_call.1} parent=1 // pred_region
      %39 = dma.done [#allocation7], 512
    $region17: #{tpu_custom_call.1} parent=1 // pred_fallthru
      _
    %p40 = scmp.eq.s32.totalorder 0, 0
    // Predicated region
    $region18: #{tpu_custom_call.1} parent=1 // pred_check
      %p41 = pneg %p40
    $region19: #{tpu_custom_call.1} parent=1 // pred_check_branch
      %43 = sbr.rel (%p41) target = $region21
    $region20: #{tpu_custom_call.1} parent=1 // pred_region
      %44 = vst [vmem:[#allocation2] sm:$0xff] 0.0
      %45 = vst [vmem:[#allocation2 + $0x8] sm:$0xff] 0.0
      %46 = vst [vmem:[#allocation2 + $0x10] sm:$0xff] 0.0
      %47 = vst [vmem:[#allocation2 + $0x18] sm:$0xff] 0.0
    $region21: #{tpu_custom_call.1} parent=1 // pred_fallthru
      _
    %v48 = vld [vmem:[#allocation3] sm:$0xff]
    %v49 = vld [vmem:[#allocation3 + $0x8] sm:$0xff]
    %v50 = vld [vmem:[#allocation3 + $0x10] sm:$0xff]
    %v51 = vld [vmem:[#allocation3 + $0x18] sm:$0xff]
    %v52 = vld [vmem:[#allocation6] sm:$0xff]
    %v53 = vld [vmem:[#allocation6 + $0x8] sm:$0xff]
    %v54 = vld [vmem:[#allocation6 + $0x10] sm:$0xff]
    %v55 = vld [vmem:[#allocation6 + $0x18] sm:$0xff]
    %v56 = vsub.f32 %v48, %v52
    %v57 = vsub.f32 %v49, %v53
    %v58 = vsub.f32 %v50, %v54
    %v59 = vsub.f32 %v51, %v55
    %v60 = vmul.f32 %v56, %v56
    %v61 = vmul.f32 %v57, %v57
    %v62 = vmul.f32 %v58, %v58
    %v63 = vmul.f32 %v59, %v59
    %v64 = vld [vmem:[#allocation2] sm:$0xff]
    %v65 = vld [vmem:[#allocation2 + $0x8] sm:$0xff]
    %v66 = vld [vmem:[#allocation2 + $0x10] sm:$0xff]
    %v67 = vld [vmem:[#allocation2 + $0x18] sm:$0xff]
    %v68 = vadd.f32 %v60, 0.0
    %v69 = vadd.f32 %v61, 0.0
    %v70 = vadd.f32 %v62, 0.0
    %v71 = vadd.f32 %v63, 0.0
    %v72 = vadd.f32 %v64, %v68
    %v73 = vadd.f32 %v65, %v69
    %v74 = vadd.f32 %v66, %v70
    %v75 = vadd.f32 %v67, %v71
    %76 = vst [vmem:[#allocation2] sm:$0xff] %v72
    %77 = vst [vmem:[#allocation2 + $0x8] sm:$0xff] %v73
    %78 = vst [vmem:[#allocation2 + $0x10] sm:$0xff] %v74
    %79 = vst [vmem:[#allocation2 + $0x18] sm:$0xff] %v75
    // Predicated region
    $region22: #{tpu_custom_call.1} parent=1 // pred_check
      %p80 = pneg %p40
    $region23: #{tpu_custom_call.1} parent=1 // pred_check_branch
      %82 = sbr.rel (%p80) target = $region25
    $region24: #{tpu_custom_call.1} parent=1 // pred_region
      %v83 = vld [vmem:[#allocation2] sm:$0xff]
      %v84 = vld [vmem:[#allocation2 + $0x8] sm:$0xff]
      %v85 = vld [vmem:[#allocation2 + $0x10] sm:$0xff]
      %v86 = vld [vmem:[#allocation2 + $0x18] sm:$0xff]
      %v87 = vadd.f32 %v83, %v84
      %v88 = vadd.f32 %v87, %v85
      %v89 = vadd.f32 %v88, %v86
      %90 = vadd.xlane.f32.xlu0 %v89
      %v91 = vpop.xlane.xlu0 %90
      %v92 = vrot.slane %v91, 4
      %v93 = vadd.f32 %v91, %v92
      %v94 = vrot.slane %v93, 2
      %v95 = vadd.f32 %v93, %v94
      %v96 = vrot.slane %v95, 1
      %v97 = vadd.f32 %v95, %v96
      %s98 = vtos %v97
      %s99 = smul.f32 %s98, 0.0009765625
      %s100 = sadd.f32 %s99, 1e-06
      %v101 = vstv %s100
      %v102 = vrsqrt.pop %v101
      %v103 = vmul.f32 %v102, %v101
      %v104 = vmul.f32 %v103, %v102
      %v105 = vmul.f32 0.5, %v104
      %v106 = vsub.f32 1.5, %v105
      %v107 = vmul.f32 %v102, %v106
      %v108 = vmul.f32 %v101, %v107
      %vm109 = vcmp.eq.f32.partialorder %v101, inf
      %v110 = vsel %vm109, %v101, %v108
      %vm111 = vcmp.eq.f32.partialorder %v101, 0.0
      %v112 = vand.u32 %v101, 2147483648
      %v113 = vsel %vm111, %v112, %v110
      %s114 = vtos %v113
      %s115 = scalar_lea.smem [#allocation8], 0
      %116 = sst [smem:[%s115]] %s114
    $region25: #{tpu_custom_call.1} parent=1 // pred_fallthru
      _
    // Predicated region
    $region26: #{tpu_custom_call.1} parent=1 // pred_check
      _
    $region27: #{tpu_custom_call.1} parent=1 // pred_check_branch
      %118 = sbr.rel (0) target = $region29
    $region28: #{tpu_custom_call.1} parent=1 // pred_region
      %120 = vsyncadd [#allocation5], 0
      %s122 = sshll.u32 %s2, 4
      %s123 = int_to_ptr.hbm [resolvable:$true] %s122
      %125 = dma.smem_to_hbm [#allocation8], 16, %s123, [#allocation5]
    $region29: #{tpu_custom_call.1} parent=1 // pred_fallthru
      _
    // Predicated region
    $region30: #{tpu_custom_call.1} parent=1 // pred_check
      _
    $region31: #{tpu_custom_call.1} parent=1 // pred_check_branch
      %127 = sbr.rel (0) target = $region33
    $region32: #{tpu_custom_call.1} parent=1 // pred_region
      %129 = dma.done [#allocation5], 16
    $region33: #{tpu_custom_call.1} parent=1 // pred_fallthru
      _
    %130 = sfence
    %131 = vsyncpa [#allocation4], 1
    %132 = vsyncpa [#allocation7], 1
    %133 = vsyncpa [#allocation5], 1

</llo_original>
